<compile_context>
chip_gen: v5e
topology: v5e:2x2
jax: 0.10.0
libtpu: 0.0.40
codegen_flags: <defaults>
</compile_context>

<pallas_src>
import functools

import jax
import jax.numpy as jnp
from jax import lax
from jax.experimental import pallas as pl
from jax.experimental.pallas import tpu as pltpu


_VMEM_LIMIT_BYTES = 48 * 1024 * 1024      # explicit scoped-VMEM limit (safe on v5e/v6e/v7x)
_DEFAULT_TILE_BUDGET = 32 * 1024 * 1024   # our own tile-plan accounting budget (headroom on v7x)


def _round_up(x, m):
    return ((x + m - 1) // m) * m


# ---------------------------------------------------------------------------
# Kernel 1: Linear projection  y = x @ W.T + b   (full-K weight resident,
# N-outer grid, bias fused into the single store).
# ---------------------------------------------------------------------------
def _linear_kernel(x_ref, wt_ref, bias_ref, o_ref):
    # x_ref: (tm, Kp), wt_ref: (Kp, tn), bias_ref: (1, tn), o_ref: (tm, tn)
    o_ref[...] = (
        jnp.dot(x_ref[...], wt_ref[...], preferred_element_type=jnp.float32)
        + bias_ref[...].astype(jnp.float32)
    ).astype(o_ref.dtype)


@functools.partial(jax.jit, static_argnames=("tm", "tn"))
def _linear_pallas(x, w_t, bias, *, tm, tn):
    Bp, Kp = x.shape
    Np = w_t.shape[1]
    n_tiles_n = Np // tn
    # N-tiles on the OUTER axis -> the (Kp, tn) weight block index is constant
    # across all inner i-steps, so each weight tile is DMA'd exactly once and
    # can be kept single-buffered (pl.Buffered(1)).
    grid = (n_tiles_n, Bp // tm)
    # v7x megacore: split on N (disjoint weight tiles).  Only fall back to a
    # batch split when N has a single tile.
    dims = ("parallel", "parallel") if n_tiles_n == 1 else ("parallel", "arbitrary")
    return pl.pallas_call(
        _linear_kernel,
        out_shape=jax.ShapeDtypeStruct((Bp, Np), x.dtype),
        grid_spec=pltpu.PrefetchScalarGridSpec(
            num_scalar_prefetch=0,
            grid=grid,
            in_specs=[
                pl.BlockSpec((tm, Kp), lambda j, i: (i, 0)),   # x streams (double-buffered)
                pl.BlockSpec((Kp, tn), lambda j, i: (0, j),
                             pipeline_mode=pl.Buffered(1)),    # weight: resident, 1 buffer
                pl.BlockSpec((1, tn), lambda j, i: (0, j)),    # bias
            ],
            out_specs=pl.BlockSpec((tm, tn), lambda j, i: (i, j)),
        ),
        compiler_params=pltpu.CompilerParams(
            dimension_semantics=dims,
            vmem_limit_bytes=_VMEM_LIMIT_BYTES),
    )(x, w_t, bias)


# ---------------------------------------------------------------------------
# Kernel 1b: K-tiled accumulator fallback for very large feature_dim, where
# the full-K weight block would not fit in the VMEM budget.
# ---------------------------------------------------------------------------
def _linear_kernel_ktiled(x_ref, wt_ref, bias_ref, o_ref, acc_ref):
    @pl.when(pl.program_id(2) == 0)
    def _():
        acc_ref[...] = jnp.zeros_like(acc_ref)

    acc_ref[...] += jnp.dot(x_ref[...], wt_ref[...],
                            preferred_element_type=jnp.float32)

    @pl.when(pl.program_id(2) == pl.num_programs(2) - 1)
    def _():
        o_ref[...] = (acc_ref[...]
                      + bias_ref[...].astype(jnp.float32)).astype(o_ref.dtype)


@functools.partial(jax.jit, static_argnames=("tm", "tn", "tk"))
def _linear_pallas_ktiled(x, w_t, bias, *, tm, tn, tk):
    Bp, Kp = x.shape
    Np = w_t.shape[1]
    grid = (Np // tn, Bp // tm, Kp // tk)
    return pl.pallas_call(
        _linear_kernel_ktiled,
        out_shape=jax.ShapeDtypeStruct((Bp, Np), x.dtype),
        grid_spec=pltpu.PrefetchScalarGridSpec(
            num_scalar_prefetch=0,
            grid=grid,
            in_specs=[
                pl.BlockSpec((tm, tk), lambda j, i, k: (i, k)),
                pl.BlockSpec((tk, tn), lambda j, i, k: (k, j)),
                pl.BlockSpec((1, tn), lambda j, i, k: (0, j)),
            ],
            out_specs=pl.BlockSpec((tm, tn), lambda j, i, k: (i, j)),
            scratch_shapes=[pltpu.VMEM((tm, tn), jnp.float32)],
        ),
        compiler_params=pltpu.CompilerParams(
            dimension_semantics=("parallel", "parallel", "arbitrary"),
            vmem_limit_bytes=_VMEM_LIMIT_BYTES),
    )(x, w_t, bias)


# ---------------------------------------------------------------------------
# Kernel 2: fused Linear + training-mode BatchNorm1d epilogue.
# Used when the whole (padded) batch fits one row tile: the full batch of one
# column tile is produced in VMEM, so per-feature batch stats can be computed
# before the single store (no extra HBM round trip).
# ---------------------------------------------------------------------------
def _linear_bn_kernel(x_ref, wt_ref, bias_ref, gamma_ref, beta_ref, o_ref,
                      *, n_valid, eps):
    y = jnp.dot(x_ref[...], wt_ref[...], preferred_element_type=jnp.float32)
    y = y + bias_ref[...].astype(jnp.float32)                 # (Bp, tn) f32
    n_rows = y.shape[0]
    if n_valid == n_rows:
        mean = jnp.mean(y, axis=0, keepdims=True)
        diff = y - mean
        var = jnp.mean(diff * diff, axis=0, keepdims=True)    # biased (PyTorch)
    else:
        # Padded batch rows carry the bias after the matmul -> mask them out
        # of the statistics.
        rows = lax.broadcasted_iota(jnp.int32, y.shape, 0)
        valid = rows < n_valid
        inv_n = 1.0 / float(n_valid)
        mean = jnp.sum(jnp.where(valid, y, 0.0), axis=0, keepdims=True) * inv_n
        diff = jnp.where(valid, y - mean, 0.0)
        var = jnp.sum(diff * diff, axis=0, keepdims=True) * inv_n
    inv_std = lax.rsqrt(var + eps)
    o_ref[...] = (
        (y - mean) * inv_std * gamma_ref[...].astype(jnp.float32)
        + beta_ref[...].astype(jnp.float32)
    ).astype(o_ref.dtype)


@functools.partial(jax.jit, static_argnames=("tn", "n_valid", "eps"))
def _linear_bn_pallas(x, w_t, bias, gamma, beta, *, tn, n_valid, eps):
    Bp, Kp = x.shape
    Np = w_t.shape[1]
    kernel = functools.partial(_linear_bn_kernel, n_valid=n_valid, eps=eps)
    return pl.pallas_call(
        kernel,
        out_shape=jax.ShapeDtypeStruct((Bp, Np), x.dtype),
        grid_spec=pltpu.PrefetchScalarGridSpec(
            num_scalar_prefetch=0,
            grid=(Np // tn,),
            in_specs=[
                # x is constant across the whole grid: keep a single buffer.
                pl.BlockSpec((Bp, Kp), lambda j: (0, 0),
                             pipeline_mode=pl.Buffered(1)),
                pl.BlockSpec((Kp, tn), lambda j: (0, j)),      # weight streams
                pl.BlockSpec((1, tn), lambda j: (0, j)),       # bias
                pl.BlockSpec((1, tn), lambda j: (0, j)),       # gamma
                pl.BlockSpec((1, tn), lambda j: (0, j)),       # beta
            ],
            out_specs=pl.BlockSpec((Bp, tn), lambda j: (0, j)),
        ),
        compiler_params=pltpu.CompilerParams(
            dimension_semantics=("parallel",),
            vmem_limit_bytes=_VMEM_LIMIT_BYTES),
    )(x, w_t, bias, gamma, beta)


# ---------------------------------------------------------------------------
# Kernel 3: standalone training-mode BatchNorm1d (large-batch path only).
# ---------------------------------------------------------------------------
def _bn_kernel(y_ref, gamma_ref, beta_ref, o_ref, *, n_valid, eps):
    y = y_ref[...].astype(jnp.float32)                         # (Bp, tn)
    n_rows = y.shape[0]
    if n_valid == n_rows:
        mean = jnp.mean(y, axis=0, keepdims=True)
        diff = y - mean
        var = jnp.mean(diff * diff, axis=0, keepdims=True)
    else:
        rows = lax.broadcasted_iota(jnp.int32, y.shape, 0)
        valid = rows < n_valid
        inv_n = 1.0 / float(n_valid)
        mean = jnp.sum(jnp.where(valid, y, 0.0), axis=0, keepdims=True) * inv_n
        diff = jnp.where(valid, y - mean, 0.0)
        var = jnp.sum(diff * diff, axis=0, keepdims=True) * inv_n
    inv_std = lax.rsqrt(var + eps)
    o_ref[...] = (
        (y - mean) * inv_std * gamma_ref[...].astype(jnp.float32)
        + beta_ref[...].astype(jnp.float32)
    ).astype(o_ref.dtype)


@functools.partial(jax.jit, static_argnames=("tn", "n_valid", "eps"),
                   donate_argnums=(0,))
def _bn_pallas(y, gamma, beta, *, tn, n_valid, eps):
    Bp, Np = y.shape
    kernel = functools.partial(_bn_kernel, n_valid=n_valid, eps=eps)
    return pl.pallas_call(
        kernel,
        out_shape=jax.ShapeDtypeStruct((Bp, Np), y.dtype),
        grid_spec=pltpu.PrefetchScalarGridSpec(
            num_scalar_prefetch=0,
            grid=(Np // tn,),
            in_specs=[
                pl.BlockSpec((Bp, tn), lambda j: (0, j)),      # full batch per tile
                pl.BlockSpec((1, tn), lambda j: (0, j)),       # gamma
                pl.BlockSpec((1, tn), lambda j: (0, j)),       # beta
            ],
            out_specs=pl.BlockSpec((Bp, tn), lambda j: (0, j)),
        ),
        input_output_aliases={0: 0},   # normalize in place (y is an intermediate)
        compiler_params=pltpu.CompilerParams(
            dimension_semantics=("parallel",),
            vmem_limit_bytes=_VMEM_LIMIT_BYTES),
    )(y, gamma, beta)


# ---------------------------------------------------------------------------
# One-time parameter preparation (hoisted out of the forward path).
# ---------------------------------------------------------------------------
def prepare_params(params):
    """Transpose + zero-pad the weight/bias (and BN affine params) ONCE."""
    w, b = params["w"], params["b"]
    N, K = w.shape
    Kp = _round_up(K, 128)
    Np = _round_up(N, 128)   # minimal lane-aligned N padding
    # TODO(synk): when compute-bound on v6e/v7x, padding Kp/Np to 256 gives a
    # slightly cleaner 256x256-MXU cadence.
    out = {
        "w_t": jnp.pad(w.T, ((0, Kp - K), (0, Np - N))),
        "bias": jnp.pad(b.reshape(1, -1), ((0, 0), (0, Np - N))),
        "K": K, "N": N,
    }
    if "gamma" in params:
        out["gamma_p"] = jnp.pad(params["gamma"].reshape(1, -1),
                                 ((0, 0), (0, Np - N)))
        out["beta_p"] = jnp.pad(params["beta"].reshape(1, -1),
                                ((0, 0), (0, Np - N)))
    return out


# ---------------------------------------------------------------------------
# Tile planning (VMEM-budgeted, waste-minimizing).
# ---------------------------------------------------------------------------
def _select_tn(Np):
    best_t, best_key = Np, None
    for t in (512, 384, 256, 128):
        if t > Np or Np % t:
            continue
        key = (0 if Np // t >= 2 else 1, -t)   # prefer >=2 N tiles (v7x megacore)
        if best_key is None or key < best_key:
            best_key, best_t = key, t
    return best_t


def _select_tm(B):
    bmin = _round_up(B, 8)
    cands = [t for t in (256, 128, 64, 32, 16, 8) if t <= bmin]
    if bmin <= 256 and bmin not in cands:
        cands.append(bmin)
    best_t, best_key = None, None
    for t in cands:
        key = (_round_up(B, t), -t)            # minimize padded rows, then fewer steps
        if best_key is None or key < best_key:
            best_key, best_t = key, t
    return best_t


def _plan(B, Kp, Np, want_fused_bn, budget):
    F32 = 4
    tm = _select_tm(B)
    Bp = _round_up(B, tm)
    tn0 = _select_tn(Np)

    def shrink_tn(t):
        for s in (384, 256, 128):
            if s < t and Np % s == 0:
                return s
        return None

    # 1) Fused linear+BN: whole padded batch in one row tile.
    if want_fused_bn and Bp <= 256 and tm == Bp:
        t = tn0
        while t is not None:
            use = (Bp * Kp + 2 * Kp * t + 4 * Bp * t) * F32
            if use <= budget:
                return {"mode": "fused", "tm": Bp, "tn": t, "Bp": Bp}
            t = shrink_tn(t)

    # 2) Full-K-resident weight, N-outer grid.
    t, m = tn0, tm
    while True:
        use = (2 * m * Kp + Kp * t + 2 * m * t) * F32
        if use <= budget:
            return {"mode": "resident", "tm": m, "tn": t, "Bp": _round_up(B, m)}
        t2 = shrink_tn(t)
        if t2 is not None:
            t = t2
        elif m > 8:
            m = max(8, _round_up(m // 2, 8))
        else:
            break

    # 3) K-tiled accumulator fallback (very large feature_dim).
    m = min(_round_up(B, 8), 128)
    tn_k = 128
    q = Kp // 128
    tk = 128
    for d in range(q, 0, -1):
        if q % d:
            continue
        cand = 128 * d
        if (2 * m * cand + 2 * cand * tn_k + 3 * m * tn_k) * F32 <= budget:
            tk = cand
            break
    return {"mode": "ktiled", "tm": m, "tn": tn_k, "tk": tk,
            "Bp": _round_up(B, m)}


def _select_bn_tn(Bp, Np, cap_bytes=8 * 1024 * 1024):
    for t in (512, 384, 256, 128):
        if Np % t == 0 and Bp * t * 4 * 4 <= cap_bytes:
            return t
    return 128


# ---------------------------------------------------------------------------
# Forward pass.
# ---------------------------------------------------------------------------
def feat_projection_forward(x, params, *, type="ori", eps=1e-5,
                            vmem_tile_budget=_DEFAULT_TILE_BUDGET):
    """JAX/Pallas equivalent of feat_projection.forward.

    x:      (B, feature_dim)
    params: either raw {'w','b','gamma','beta'} or the dict returned by
            prepare_params() (raw params are prepared once and cached).
    """
    if "w_t" not in params:
        params.update(prepare_params(params))   # one-time; cached in the dict

    B, K = x.shape
    assert K == params["K"], "feature_dim mismatch"
    N = params["N"]
    w_t, bias = params["w_t"], params["bias"]
    Kp, Np = w_t.shape

    want_bn = (type == "bn")
    plan = _plan(B, Kp, Np, want_fused_bn=want_bn, budget=vmem_tile_budget)
    Bp = plan["Bp"]

    xp = jnp.pad(x, ((0, Bp - B), (0, Kp - K))) if (Bp != B or Kp != K) else x

    if plan["mode"] == "fused":
        y = _linear_bn_pallas(xp, w_t, bias, params["gamma_p"], params["beta_p"],
                              tn=plan["tn"], n_valid=B, eps=eps)
        return y[:B, :N]

    if plan["mode"] == "resident":
        y = _linear_pallas(xp, w_t, bias, tm=plan["tm"], tn=plan["tn"])
    else:  # "ktiled"
        y = _linear_pallas_ktiled(xp, w_t, bias,
                                  tm=plan["tm"], tn=plan["tn"], tk=plan["tk"])

    if want_bn:
        tn_bn = _select_bn_tn(Bp, Np)
        y = _bn_pallas(y, params["gamma_p"], params["beta_p"],
                       tn=tn_bn, n_valid=B, eps=eps)
    return y[:B, :N]


def init_params(key, feature_dim, projection_dim, dtype=jnp.float32):
    """Deterministic synthetic parameters (shapes match the PyTorch module)."""
    kw, kb = jax.random.split(key)
    bound = 1.0 / (feature_dim ** 0.5)
    w = jax.random.uniform(kw, (projection_dim, feature_dim), dtype,
                           minval=-bound, maxval=bound)
    b = jax.random.uniform(kb, (projection_dim,), dtype,
                           minval=-bound, maxval=bound)
    gamma = jnp.ones((projection_dim,), dtype)
    beta = jnp.zeros((projection_dim,), dtype)
    return {"w": w, "b": b, "gamma": gamma, "beta": beta}


if __name__ == "__main__":
    key = jax.random.PRNGKey(0)
    kx, kp, kx2, kp2 = jax.random.split(key, 4)

    # --- small projection head: exercises B/K padding + fused BN epilogue ---
    B, feature_dim, projection_dim = 6, 40, 256
    x = jax.random.normal(kx, (B, feature_dim), jnp.float32)
    params = init_params(kp, feature_dim, projection_dim)
    prepped = prepare_params(params)          # one-time cached padded W.T / bias

    y = jax.block_until_ready(feat_projection_forward(x, prepped, type="ori"))
    y_ref = x @ params["w"].T + params["b"]
    assert y.shape == (B, projection_dim)
    assert jnp.allclose(y, y_ref, atol=1e-4, rtol=1e-4), "ori path mismatch"

    ybn = jax.block_until_ready(feat_projection_forward(x, prepped, type="bn"))
    mean = jnp.mean(y_ref, axis=0)
    var = jnp.mean((y_ref - mean) ** 2, axis=0)
    ybn_ref = (y_ref - mean) / jnp.sqrt(var + 1e-5) * params["gamma"] + params["beta"]
    assert ybn.shape == (B, projection_dim)
    assert jnp.allclose(ybn, ybn_ref, atol=1e-4, rtol=1e-4), "fused bn path mismatch"

    # --- force the K-tiled fallback + standalone BN via a tiny tile budget ---
    B2, K2, N2 = 12, 300, 384
    x2 = jax.random.normal(kx2, (B2, K2), jnp.float32)
    params2 = init_params(kp2, K2, N2)
    prepped2 = prepare_params(params2)
    y2 = jax.block_until_ready(
        feat_projection_forward(x2, prepped2, type="bn", vmem_tile_budget=200_000))
    y2_lin = x2 @ params2["w"].T + params2["b"]
    m2 = jnp.mean(y2_lin, axis=0)
    v2 = jnp.mean((y2_lin - m2) ** 2, axis=0)
    y2_ref = (y2_lin - m2) / jnp.sqrt(v2 + 1e-5) * params2["gamma"] + params2["beta"]
    assert y2.shape == (B2, N2)
    assert jnp.allclose(y2, y2_ref, atol=5e-4, rtol=5e-4), "ktiled/bn path mismatch"

    print("KERNEL_OK")
</pallas_src>

<mosaic_0001>
module attributes {stable_mosaic.version = 11 : i64} {
  func.func @_linear_kernel(%arg0: i32, %arg1: i32, %arg2: memref<8x128xf32, #tpu.memory_space<vmem>>, %arg3: memref<128x128xf32, #tpu.memory_space<vmem>>, %arg4: memref<1x128xf32, #tpu.memory_space<vmem>>, %arg5: memref<8x128xf32, #tpu.memory_space<vmem>>) attributes {dimension_semantics = [#tpu.dimension_semantics<parallel>, #tpu.dimension_semantics<arbitrary>], iteration_bounds = array<i64: 2, 1>, scalar_prefetch = 0 : i64, scratch_operands = 0 : i64, tpu.core_type = #tpu.core_type<tc>, window_params = [{transform_indices = @transform_0, window_bounds = array<i64: 8, 128>}, {pipeline_mode = #tpu.pipeline_mode<synchronous>, transform_indices = @transform_1, window_bounds = array<i64: 128, 128>}, {transform_indices = @transform_2, window_bounds = array<i64: 1, 128>}, {transform_indices = @transform_3, window_bounds = array<i64: 8, 128>}]} {
    %c0 = arith.constant 0 : index
    %c0_0 = arith.constant 0 : index
    %0 = vector.load %arg2[%c0, %c0_0] : memref<8x128xf32, #tpu.memory_space<vmem>>, vector<8x128xf32>
    %c0_1 = arith.constant 0 : index
    %c0_2 = arith.constant 0 : index
    %1 = vector.load %arg3[%c0_1, %c0_2] : memref<128x128xf32, #tpu.memory_space<vmem>>, vector<128x128xf32>
    %cst = arith.constant dense<0.000000e+00> : vector<8x128xf32>
    %2 = tpu.matmul %0, %1, %cst {dimension_numbers = #tpu.dot_dimension_numbers<[1], [0], [0], [1], [0, 0, 1, 1], [], []>} : vector<8x128xf32>, vector<128x128xf32>, vector<8x128xf32> -> vector<8x128xf32>
    %c0_3 = arith.constant 0 : index
    %c0_4 = arith.constant 0 : index
    %3 = vector.load %arg4[%c0_3, %c0_4] : memref<1x128xf32, #tpu.memory_space<vmem>>, vector<1x128xf32>
    %4 = vector.broadcast %3 : vector<1x128xf32> to vector<8x128xf32>
    %5 = arith.addf %2, %4 : vector<8x128xf32>
    %c0_5 = arith.constant 0 : index
    %c0_6 = arith.constant 0 : index
    %6 = vector.load %arg5[%c0_5, %c0_6] : memref<8x128xf32, #tpu.memory_space<vmem>>, vector<8x128xf32>
    tpu.vector_store %arg5[%c0_5, %c0_6], %5 {strides = array<i32>} : memref<8x128xf32, #tpu.memory_space<vmem>>, vector<8x128xf32>,
    return
  }
  func.func @transform_0(%arg0: i32, %arg1: i32) -> (i32, i32) {
    %c0_i32 = arith.constant 0 : i32
    %c0_i32_0 = arith.constant 0 : i32
    return %arg1, %c0_i32 : i32, i32
  }
  func.func @transform_1(%arg0: i32, %arg1: i32) -> (i32, i32) {
    %c0_i32 = arith.constant 0 : i32
    %c0_i32_0 = arith.constant 0 : i32
    return %c0_i32, %arg0 : i32, i32
  }
  func.func @transform_2(%arg0: i32, %arg1: i32) -> (i32, i32) {
    %c0_i32 = arith.constant 0 : i32
    %c0_i32_0 = arith.constant 0 : i32
    return %c0_i32, %arg0 : i32, i32
  }
  func.func @transform_3(%arg0: i32, %arg1: i32) -> (i32, i32) {
    %c0_i32 = arith.constant 0 : i32
    return %arg1, %arg0 : i32, i32
  }
}

</mosaic_0001>

<llo_original>
// kernel: _linear_pallas.1
$region0: #{_linear_pallas.1}
  #allocation0 [shape = 'u32[]', space=smem, size = 0x4, offset = 0x4, fixed_abs, tag = 'smem constant byte address 0x4 - core index']
  #allocation1 [shape = 'u32[72,128]{1,0:T(1,128)}', space=vmem, size = 0x9000, scoped, tag = 'internal scratch']
  %s0 = inlined_call_operand.hbm [shape: f32[8,128], index: 0, kind: input, shape index: {}]
  %s1 = inlined_call_operand.hbm [shape: f32[128,256], index: 1, kind: input, shape index: {}]
  %s2 = inlined_call_operand.hbm [shape: f32[1,256], index: 2, kind: input, shape index: {}]
  %s3 = inlined_call_operand.hbm [shape: f32[8,256], index: 3, kind: output, shape index: {}]
  %s4 = sld [smem:[#allocation0]]
  $region57: #{_linear_pallas.1} parent=0
    _
  %s6 = ssub.s32 1, %s4
  %s7 = scalar_select 0, %s6, %s4
  $region1: #{_linear_pallas.1} parent=0
    #allocation2 [shape = 'u8[4096]{0}', space=vmem, size = 0x1000, scoped, tag = 'input window, operand 0, single buffered']
    #allocation3 [shape = 's32[2]{0}', space=sflag, size = 0x8, scoped, tag = 'scoped memory for _linear_pallas.1']
    #allocation4 [shape = 's32[2]{0}', space=sflag, size = 0x8, scoped, tag = 'scoped memory for _linear_pallas.1']
    #allocation5 [shape = 'u8[65536]{0}', space=vmem, size = 0x10000, scoped, tag = 'input window, operand 1, single buffered']
    #allocation6 [shape = 's32[1]{0}', space=sflag, size = 0x4, scoped, tag = 'scoped memory for _linear_pallas.1']
    #allocation7 [shape = 'u8[1024]{0}', space=vmem, size = 0x400, scoped, tag = 'input window, operand 2']
    #allocation8 [shape = 'u8[8192]{0}', space=vmem, size = 0x2000, scoped, tag = 'output window, operand 0']
    %8 = vsyncpa [#allocation3], 0
    %9 = vsyncpa [#allocation6], 0
    %10 = vsyncpa [#allocation4], 0
    %s11 = scalar_lea.sflag [#allocation4], 1
    %12 = vsyncpa %s11, 0
    loop: start=0, step=1, limit=4
    $region2: #{_linear_pallas.1} parent=1 // loop_pre_header
      _
    $region3: #{_linear_pallas.1} parent=1 // loop_header
      %s14 = sphi 0, %s18
      %p15 = scmp.ge.s32.totalorder %s14, 4
      %s21 = sphi 0, %s33
      %s22 = sphi 0, %s29
      %s23 = sphi 0, %s21
      %s24 = sphi 0, %s22
      %s25 = sphi 0, %s23
      %s26 = sphi 0, %s24
      %s36 = sphi 0, %s38
      %s39 = sphi 0, %s36
      %s40 = sphi 0, %s39
      %s56 = sphi 0, %s40
      %s62 = sphi 0, %s64
      %s65 = sphi 0, %s62
      %s66 = sphi 0, %s65
      %s82 = sphi 0, %s66
      %s88 = sphi 0, %s90
      %s91 = sphi 0, %s88
      %s92 = sphi 0, %s91
      %s108 = sphi 0, %s92
      %s116 = sphi 0, %s118
      %s119 = sphi 0, %s116
      %s120 = sphi 0, %s119
      %s136 = sphi 0, %s120
    $region4: #{_linear_pallas.1} parent=1 // loop_header_branch
      %17 = sbr.rel (%p15) target = $region8
    $region5: #{_linear_pallas.1} parent=1 // loop_body
      %s19 = ssub.s32 %s14, 1
      %s20 = ssub.s32 %s14, 2
      %s27 = sadd.s32 1, %s22
      %p28 = scmp.ge.s32.totalorder %s27, 1
      %s29 = scalar_select %p28, 0, %s27
      %s30 = sadd.s32 1, %s21
      %s31 = scalar_select %p28, %s30, %s21
      %p32 = scmp.ge.s32.totalorder %s31, 2
      %s33 = scalar_select %p32, 0, %s31
      %s34 = ssub.s32 %s22, %s29
      %p35 = scmp.eq.s32.totalorder %s34, 0
      %s37 = sadd.s32 %s36, 1
      %s38 = scalar_select %p35, %s36, %s37
      %p41 = pneg %p35
      %p42 = scmp.eq.s32.totalorder %s14, 1
      %p43 = por %p41, %p42
      %p44 = scmp.ne.s32.totalorder %s36, %s39
      %p45 = scmp.eq.s32.totalorder %s14, 0
      %p46 = por %p44, %p45
      %p47 = scmp.ne.s32.totalorder %s36, %s39
      %p48 = scmp.eq.s32.totalorder %s19, 1
      %p49 = por %p47, %p48
      %p50 = scmp.ne.s32.totalorder %s39, %s40
      %p51 = scmp.eq.s32.totalorder %s19, 0
      %p52 = por %p50, %p51
      %p53 = scmp.ne.s32.totalorder %s39, %s40
      %p54 = scmp.eq.s32.totalorder %s20, 1
      %p55 = por %p53, %p54
      %p57 = scmp.ne.s32.totalorder %s40, %s56
      %p58 = scmp.eq.s32.totalorder %s20, 0
      %p59 = por %p57, %p58
      %s60 = ssub.s32 %s21, %s33
      %p61 = scmp.eq.s32.totalorder %s60, 0
      %s63 = sadd.s32 %s62, 1
      %s64 = scalar_select %p61, %s62, %s63
      %p67 = pneg %p61
      %p68 = scmp.eq.s32.totalorder %s14, 1
      %p69 = por %p67, %p68
      %p70 = scmp.ne.s32.totalorder %s62, %s65
      %p71 = scmp.eq.s32.totalorder %s14, 0
      %p72 = por %p70, %p71
      %p73 = scmp.ne.s32.totalorder %s62, %s65
      %p74 = scmp.eq.s32.totalorder %s19, 1
      %p75 = por %p73, %p74
      %p76 = scmp.ne.s32.totalorder %s65, %s66
      %p77 = scmp.eq.s32.totalorder %s19, 0
      %p78 = por %p76, %p77
      %p79 = scmp.ne.s32.totalorder %s65, %s66
      %p80 = scmp.eq.s32.totalorder %s20, 1
      %p81 = por %p79, %p80
      %p83 = scmp.ne.s32.totalorder %s66, %s82
      %p84 = scmp.eq.s32.totalorder %s20, 0
      %p85 = por %p83, %p84
      %s86 = ssub.s32 %s21, %s33
      %p87 = scmp.eq.s32.totalorder %s86, 0
      %s89 = sadd.s32 %s88, 1
      %s90 = scalar_select %p87, %s88, %s89
      %p93 = pneg %p87
      %p94 = scmp.eq.s32.totalorder %s14, 1
      %p95 = por %p93, %p94
      %p96 = scmp.ne.s32.totalorder %s88, %s91
      %p97 = scmp.eq.s32.totalorder %s14, 0
      %p98 = por %p96, %p97
      %p99 = scmp.ne.s32.totalorder %s88, %s91
      %p100 = scmp.eq.s32.totalorder %s19, 1
      %p101 = por %p99, %p100
      %p102 = scmp.ne.s32.totalorder %s91, %s92
      %p103 = scmp.eq.s32.totalorder %s19, 0
      %p104 = por %p102, %p103
      %p105 = scmp.ne.s32.totalorder %s91, %s92
      %p106 = scmp.eq.s32.totalorder %s20, 1
      %p107 = por %p105, %p106
      %p109 = scmp.ne.s32.totalorder %s92, %s108
      %p110 = scmp.eq.s32.totalorder %s20, 0
      %p111 = por %p109, %p110
      %s112 = ssub.s32 %s22, %s29
      %s113 = ssub.s32 %s21, %s33
      %s114 = sor.u32 %s112, %s113
      %p115 = scmp.eq.s32.totalorder %s114, 0
      %s117 = sadd.s32 %s116, 1
      %s118 = scalar_select %p115, %s116, %s117
      %p121 = pneg %p115
      %p122 = scmp.eq.s32.totalorder %s14, 1
      %p123 = por %p121, %p122
      %p124 = scmp.ne.s32.totalorder %s116, %s119
      %p125 = scmp.eq.s32.totalorder %s14, 0
      %p126 = por %p124, %p125
      %p127 = scmp.ne.s32.totalorder %s116, %s119
      %p128 = scmp.eq.s32.totalorder %s19, 1
      %p129 = por %p127, %p128
      %p130 = scmp.ne.s32.totalorder %s119, %s120
      %p131 = scmp.eq.s32.totalorder %s19, 0
      %p132 = por %p130, %p131
      %p133 = scmp.ne.s32.totalorder %s119, %s120
      %p134 = scmp.eq.s32.totalorder %s20, 1
      %p135 = por %p133, %p134
      %p137 = scmp.ne.s32.totalorder %s120, %s136
      %p138 = scmp.eq.s32.totalorder %s20, 0
      %p139 = por %p137, %p138
      %p140 = scmp.le.s32.totalorder 1, %s14
      %p141 = scmp.lt.s32.totalorder %s14, 3
      %p142 = pnand %p140, %p141
      %p143 = pneg %p142
      // Predicated region
      $region9: #{_linear_pallas.1} parent=5 // pred_check
        _
      $region10: #{_linear_pallas.1} parent=5 // pred_check_branch
        %145 = sbr.rel (%p142) target = $region12
      $region11: #{_linear_pallas.1} parent=5 // pred_region
        %s146 = ssub.s32 %s14, 1
        // Predicated region
        $region13: #{_linear_pallas.1} parent=11 // pred_check
          %p147 = pneg %p52
        $region14: #{_linear_pallas.1} parent=11 // pred_check_branch
          %149 = sbr.rel (%p147) target = $region16
        $region15: #{_linear_pallas.1} parent=11 // pred_region
          %151 = vsyncadd [#allocation3], 0
          %s152 = smul.addr %s24, 8
          %s153 = scalar_lea.hbm %s0, %s152
          %s155 = sshll.u32 %s153, 4
          %s156 = int_to_ptr.hbm [resolvable:$true] %s155
          %s157 = sshll.u32 [#allocation2], 4
          %s158 = int_to_ptr.vmem [resolvable:$true] %s157
          %160 = dma.hbm_to_vmem [thread:$0]  %s156, 128, %s158, [#allocation3]
        $region16: #{_linear_pallas.1} parent=11 // pred_fallthru
          _
        // Predicated region
        $region17: #{_linear_pallas.1} parent=11 // pred_check
          %p161 = pneg %p78
        $region18: #{_linear_pallas.1} parent=11 // pred_check_branch
          %163 = sbr.rel (%p161) target = $region20
        $region19: #{_linear_pallas.1} parent=11 // pred_region
          %165 = vsyncadd [#allocation6], 0
          %s166 = smul.addr %s23, 8
          %s167 = scalar_lea.hbm %s1, %s166
          %s168 = sshll.u32 %s167, 4
          %s169 = int_to_ptr.hbm [resolvable:$true] %s168
          %s170 = sshll.u32 [#allocation5], 4
          %s171 = int_to_ptr.vmem [resolvable:$true] %s170
          %176 = dma.hbm_to_vmem [thread:$0]  %s169, 2048, %s171, [#allocation6], 256, 128, 8
        $region20: #{_linear_pallas.1} parent=11 // pred_fallthru
          _
      $region12: #{_linear_pallas.1} parent=5 // pred_fallthru
        _
      %p177 = scmp.lt.s32.totalorder %s14, 2
      // Predicated region
      $region21: #{_linear_pallas.1} parent=5 // pred_check
        %p178 = pneg %p177
      $region22: #{_linear_pallas.1} parent=5 // pred_check_branch
        %180 = sbr.rel (%p178) target = $region24
      $region23: #{_linear_pallas.1} parent=5 // pred_region
        // Predicated region
        $region25: #{_linear_pallas.1} parent=23 // pred_check
          %p181 = pneg %p98
        $region26: #{_linear_pallas.1} parent=23 // pred_check_branch
          %183 = sbr.rel (%p181) target = $region28
        $region27: #{_linear_pallas.1} parent=23 // pred_region
          %s184 = sand.u32 %s14, 1
          %s185 = scalar_lea.sflag [#allocation3], %s184
          %s186 = sand.u32 %s88, 1
          %s187 = scalar_lea.vmem [#allocation7], %s186
          %189 = vsyncadd %s185, 0
          %s190 = scalar_lea.hbm %s2, %s21
          %s192 = sshll.u32 %s190, 4
          %s193 = int_to_ptr.hbm [resolvable:$true] %s192
          %s194 = sshll.u32 %s187, 4
          %s195 = int_to_ptr.vmem [resolvable:$true] %s194
          %197 = dma.hbm_to_vmem [thread:$0]  %s193, 16, %s195, %s185
        $region28: #{_linear_pallas.1} parent=23 // pred_fallthru
          _
      $region24: #{_linear_pallas.1} parent=5 // pred_fallthru
        _
      %p198 = scmp.le.s32.totalorder 1, %s14
      %p199 = scmp.lt.s32.totalorder %s14, 3
      %p200 = pnand %p198, %p199
      %p201 = pneg %p200
      // Predicated region
      $region29: #{_linear_pallas.1} parent=5 // pred_check
        _
      $region30: #{_linear_pallas.1} parent=5 // pred_check_branch
        %203 = sbr.rel (%p200) target = $region32
      $region31: #{_linear_pallas.1} parent=5 // pred_region
        %s204 = ssub.s32 %s14, 1
        // Predicated region
        $region33: #{_linear_pallas.1} parent=31 // pred_check
          %p205 = pneg %p52
        $region34: #{_linear_pallas.1} parent=31 // pred_check_branch
          %207 = sbr.rel (%p205) target = $region36
        $region35: #{_linear_pallas.1} parent=31 // pred_region
          %209 = dma.done [#allocation3], 128
        $region36: #{_linear_pallas.1} parent=31 // pred_fallthru
          _
        // Predicated region
        $region37: #{_linear_pallas.1} parent=31 // pred_check
          %p210 = pneg %p78
        $region38: #{_linear_pallas.1} parent=31 // pred_check_branch
          %212 = sbr.rel (%p210) target = $region40
        $region39: #{_linear_pallas.1} parent=31 // pred_region
          %214 = dma.done [#allocation6], 2048
        $region40: #{_linear_pallas.1} parent=31 // pred_fallthru
          _
        %s215 = sand.u32 %s19, 1
        %s216 = scalar_lea.sflag [#allocation3], %s215
        %s217 = sand.u32 %s91, 1
        %s218 = scalar_lea.vmem [#allocation7], %s217
        // Predicated region
        $region41: #{_linear_pallas.1} parent=31 // pred_check
          %p219 = pneg %p104
        $region42: #{_linear_pallas.1} parent=31 // pred_check_branch
          %221 = sbr.rel (%p219) target = $region44
        $region43: #{_linear_pallas.1} parent=31 // pred_region
          %223 = dma.done %s216, 16
        $region44: #{_linear_pallas.1} parent=31 // pred_fallthru
          _
        %p224 = pneg %p52
        %p225 = pneg %p49
        %p226 = pneg %p78
        %p227 = pneg %p75
        %s228 = sand.u32 %s19, 1
        %s229 = scalar_lea.sflag [#allocation3], %s228
        %s230 = sand.u32 %s91, 1
        %s231 = scalar_lea.vmem [#allocation7], %s230
        %p232 = pneg %p104
        %p233 = pneg %p101
        %p234 = pneg %p132
        %p235 = pneg %p129
        %s236 = sand.u32 %s119, 1
        %s237 = scalar_lea.sflag [#allocation4], %s236
        %s238 = sand.u32 %s119, 1
        %s239 = smul.addr %s238, 8
        %s240 = scalar_lea.vmem [#allocation8], %s239
        %v241 = vld [vmem:[#allocation2] sm:$0xff]
        %v242 = vld [vmem:[#allocation5] sm:$0xff]
        %v243 = vld [vmem:[#allocation5 + $0x8] sm:$0xff]
        %v244 = vld [vmem:[#allocation5 + $0x10] sm:$0xff]
        %v245 = vld [vmem:[#allocation5 + $0x18] sm:$0xff]
        %v246 = vld [vmem:[#allocation5 + $0x20] sm:$0xff]
        %v247 = vld [vmem:[#allocation5 + $0x28] sm:$0xff]
        %v248 = vld [vmem:[#allocation5 + $0x30] sm:$0xff]
        %v249 = vld [vmem:[#allocation5 + $0x38] sm:$0xff]
        %v250 = vld [vmem:[#allocation5 + $0x40] sm:$0xff]
        %v251 = vld [vmem:[#allocation5 + $0x48] sm:$0xff]
        %v252 = vld [vmem:[#allocation5 + $0x50] sm:$0xff]
        %v253 = vld [vmem:[#allocation5 + $0x58] sm:$0xff]
        %v254 = vld [vmem:[#allocation5 + $0x60] sm:$0xff]
        %v255 = vld [vmem:[#allocation5 + $0x68] sm:$0xff]
        %v256 = vld [vmem:[#allocation5 + $0x70] sm:$0xff]
        %v257 = vld [vmem:[#allocation5 + $0x78] sm:$0xff]
        %v258 = vld [vmem:[%s218] sm:$0x1]
        %v260 = vperm.slane %v258, 0
        %262 = vmatpush.msra.mxu0 %v257
        %263 = vmatpush.msra.mxu0 %v256
        %264 = vmatpush.msra.mxu0 %v255
        %265 = vmatpush.msra.mxu0 %v254
        %266 = vmatpush.msra.mxu0 %v253
        %267 = vmatpush.msra.mxu0 %v252
        %268 = vmatpush.msra.mxu0 %v251
        %269 = vmatpush.msra.mxu0 %v250
        %270 = vmatpush.msra.mxu0 %v249
        %271 = vmatpush.msra.mxu0 %v248
        %272 = vmatpush.msra.mxu0 %v247
        %273 = vmatpush.msra.mxu0 %v246
        %274 = vmatpush.msra.mxu0 %v245
        %275 = vmatpush.msra.mxu0 %v244
        %276 = vmatpush.msra.mxu0 %v243
        %277 = vmatpush.msra.mxu0 %v242
        %278 = vmatmul.f32.gmra.mxu0 %v241
        %v279 = vpop.f32.mrf.mxu0
        %v280 = vadd.f32 %v260, %v279
        %281 = vdwg.mxu0
        %282 = vst [vmem:[%s240] sm:$0xff] %v280
        %s283 = sand.u32 %s119, 1
        %s284 = scalar_lea.sflag [#allocation4], %s283
        %s285 = sand.u32 %s119, 1
        %s286 = smul.addr %s285, 8
        %s287 = scalar_lea.vmem [#allocation8], %s286
        // Predicated region
        $region45: #{_linear_pallas.1} parent=31 // pred_check
          %p288 = pneg %p129
        $region46: #{_linear_pallas.1} parent=31 // pred_check_branch
          %290 = sbr.rel (%p288) target = $region48
        $region47: #{_linear_pallas.1} parent=31 // pred_region
          %292 = vsyncadd %s284, 0
          %s293 = smul.addr %s24, 2
          %s294 = sadd.s32 %s23, %s293
          %s295 = smul.addr %s294, 8
          %s296 = scalar_lea.hbm %s3, %s295
          %s298 = sshll.u32 %s287, 4
          %s299 = int_to_ptr.vmem [resolvable:$true] %s298
          %s300 = sshll.u32 %s296, 4
          %s301 = int_to_ptr.hbm [resolvable:$true] %s300
          %303 = dma.vmem_to_hbm [thread:$0]  %s299, 128, %s301, %s284
        $region48: #{_linear_pallas.1} parent=31 // pred_fallthru
          _
      $region32: #{_linear_pallas.1} parent=5 // pred_fallthru
        _
      %p304 = scmp.le.s32.totalorder 2, %s14
      // Predicated region
      $region49: #{_linear_pallas.1} parent=5 // pred_check
        %p305 = pneg %p304
      $region50: #{_linear_pallas.1} parent=5 // pred_check_branch
        %307 = sbr.rel (%p305) target = $region52
      $region51: #{_linear_pallas.1} parent=5 // pred_region
        %s308 = ssub.s32 %s14, 2
        // Predicated region
        $region53: #{_linear_pallas.1} parent=51 // pred_check
          %p309 = pneg %p135
        $region54: #{_linear_pallas.1} parent=51 // pred_check_branch
          %311 = sbr.rel (%p309) target = $region56
        $region55: #{_linear_pallas.1} parent=51 // pred_region
          %s312 = sand.u32 %s120, 1
          %s313 = scalar_lea.sflag [#allocation4], %s312
          %s314 = sand.u32 %s120, 1
          %s315 = smul.addr %s314, 8
          %s316 = scalar_lea.vmem [#allocation8], %s315
          %318 = dma.done %s313, 128
        $region56: #{_linear_pallas.1} parent=51 // pred_fallthru
          _
      $region52: #{_linear_pallas.1} parent=5 // pred_fallthru
        _
    $region6: #{_linear_pallas.1} parent=1 // loop_footer
      %s18 = sadd.s32 1, %s14
    $region7: #{_linear_pallas.1} parent=1 // loop_footer_branch
      %13 = sbr.rel target = $region3
    $region8: #{_linear_pallas.1} parent=1 // loop_exit
      _
    %319 = vsyncpa [#allocation3], 1
    %s320 = scalar_lea.sflag [#allocation3], 1
    %321 = vsyncpa %s320, 1
    %322 = vsyncpa [#allocation6], 1
    %323 = vsyncpa [#allocation4], 1
    %s324 = scalar_lea.sflag [#allocation4], 1
    %325 = vsyncpa %s324, 1

</llo_original>
